<compile_context>
chip_gen: v5e
topology: v5e:2x2
jax: 0.10.0
libtpu: 0.0.40
codegen_flags: <defaults>
</compile_context>

<pallas_src>
import functools

import numpy as np

import jax
import jax.numpy as jnp
from jax import lax
from jax.experimental import pallas as pl
from jax.experimental.pallas import tpu as pltpu


# ------------------------------ Pallas kernel ------------------------------ #

def _up_res_block_kernel(x_ref, wa_ref, ba_ref, wb_ref, bb_ref, o_ref, ypad_ref,
                         *, H, W, Wp, p, K, KB, pA, pB, C1, xbase, yvalid):
    """Fused conv1 + 1x1 shortcut + ReLU + sub-pixel conv2 + residual add.

    x_ref    : (1, Cin_p, LA)         per-row zero-padded, flattened input frame
    wa_ref   : (2*C1, K*K*Cin_p)      tap-major conv1 weight (+ shortcut rows C1:)
    ba_ref   : (2*C1, 1)              conv1 / shortcut biases (f32)
    wb_ref   : (C1, KB*KB*C1)         tap-major phase-decomposed conv2 weight
    bb_ref   : (C1, 1)
    o_ref    : (1, C1, H*Wp)          un-shuffled output at padded row pitch
                                      (channel = 4*co + 2*i + j; pad cols junk)
    ypad_ref : (C1, Lscr)             VMEM scratch: zero-padded ReLU(conv1) frame
    """
    Q = H * Wp
    Lscr = ypad_ref.shape[1]
    ybase = yvalid - p * Wp

    # Keep the scratch's zero frame (front guard + top pad rows / bottom pad
    # rows + back guard) valid.  Only [yvalid, yvalid+Q) is written below, so
    # these tiny strips are the only re-zeroing needed per step.
    if yvalid > 0:
        ypad_ref[:, :yvalid] = jnp.zeros((C1, yvalid), ypad_ref.dtype)
    if Lscr - (yvalid + Q) > 0:
        ypad_ref[:, yvalid + Q:Lscr] = jnp.zeros((C1, Lscr - yvalid - Q),
                                                 ypad_ref.dtype)

    def shifted_taps(src, base, pk, k):
        # k*k shifted (C, Q) views of a per-row zero-padded frame (pitch Wp,
        # frame origin at flat offset `base`, conv pad pk, common frame pad p).
        views = []
        for dy in range(k):
            for dx in range(k):
                s = base + (p + dy - pk) * Wp + (dx - pk)
                views.append(src[:, s:s + Q])
        return views

    # ---- stage A: conv1 (KxK, Cin -> C1) + fused 1x1 shortcut, ONE matmul ---- #
    xf = x_ref[0]                                              # (Cin_p, LA)
    ta = jnp.concatenate(shifted_taps(xf, xbase, pA, K), axis=0)
    acc_a = jnp.dot(wa_ref[...], ta, preferred_element_type=jnp.float32)
    acc_a = acc_a + ba_ref[...]
    y1 = jnp.maximum(acc_a[:C1, :], 0.0)     # ReLU (commutes with PixelShuffle)
    res = acc_a[C1:, :]                      # shortcut path: no activation

    # Zero the in-row pad columns so the scratch is a correct zero-padded frame
    # for stage B (junk there would otherwise leak into valid outputs).
    if p > 0:
        colw = lax.broadcasted_iota(jnp.int32, (1, Q), 1) % Wp
        y1 = jnp.where((colw >= p) & (colw < p + W), y1, 0.0)
    ypad_ref[:, yvalid:yvalid + Q] = y1.astype(ypad_ref.dtype)

    # ---- stage B: conv2 as sub-pixel conv on the un-shuffled map, ONE matmul ---- #
    yf = ypad_ref[...]                                         # (C1, Lscr)
    tb = jnp.concatenate(shifted_taps(yf, ybase, pB, KB), axis=0)
    acc_b = jnp.dot(wb_ref[...], tb, preferred_element_type=jnp.float32)
    # junk in pad columns of acc_b/res flows to pad columns of the output,
    # which the wrapper crops; valid columns are exact.
    o_ref[0] = (acc_b + bb_ref[...] + res).astype(o_ref.dtype)


# --------------------------- weight repacking ------------------------------ #

def _pack_stage_a(w1, b1, ws, bs, Cin_p):
    """Pack conv1 (KxK) and the 1x1 shortcut into one tap-major matmul weight.

    w1: (C1, Cin, K, K) OIHW; ws: (C1, Cin, 1, 1).
    Returns wa: (2*C1, K*K*Cin_p) with column index t*Cin_p + ci (t = dy*K+dx),
    rows [0:C1] = conv1, rows [C1:] = shortcut at the centre tap; ba: (2*C1, 1).
    """
    C1, Cin, K, _ = w1.shape
    assert K % 2 == 1, "only odd kernel_size (PyTorch padding=(k-1)//2)"
    pA = (K - 1) // 2
    wa = np.zeros((2 * C1, K * K * Cin_p), np.float32)
    for dy in range(K):
        for dx in range(K):
            t = dy * K + dx
            wa[:C1, t * Cin_p:t * Cin_p + Cin] = w1[:, :, dy, dx]
    t_c = pA * K + pA
    wa[C1:, t_c * Cin_p:t_c * Cin_p + Cin] = ws[:, :, 0, 0]
    ba = np.concatenate([np.asarray(b1, np.float32),
                         np.asarray(bs, np.float32)]).reshape(2 * C1, 1)
    return wa, ba


def _pack_stage_b(w2, b2):
    """Sub-pixel decomposition of `conv2 applied after PixelShuffle(2)`.

    w2: (Co, Ci, K, K) OIHW.  Returns wb: (4*Co, KB*KB*4*Ci) acting directly on
    the *un-shuffled* conv1 output (input column t*C1 + 4*ci + 2*i2 + j2, output
    row 4*co + 2*i + j, (i,j)/(i2,j2) the 2x2 sub-pixel phases), bb: (4*Co, 1).
    """
    Co, Ci, K, _ = w2.shape
    assert K % 2 == 1, "only odd kernel_size"
    pk = (K - 1) // 2
    dhs = sorted({(i + ky - pk) // 2 for i in (0, 1) for ky in range(K)})
    pB = -dhs[0]
    assert dhs[-1] == pB, "expected a symmetric low-res tap range for odd K"
    KB = 2 * pB + 1
    C1 = 4 * Ci
    wb = np.zeros((4 * Co, KB * KB * C1), np.float32)
    for co in range(Co):
        for i in (0, 1):
            for j in (0, 1):
                row = 4 * co + 2 * i + j
                for ci in range(Ci):
                    for ky in range(K):
                        dh, i2 = divmod(i + ky - pk, 2)
                        for kx in range(K):
                            dw, j2 = divmod(j + kx - pk, 2)
                            t = (dh + pB) * KB + (dw + pB)
                            col = t * C1 + 4 * ci + 2 * i2 + j2
                            wb[row, col] += w2[co, ci, ky, kx]
    bb = np.repeat(np.asarray(b2, np.float32), 4).reshape(4 * Co, 1)
    return wb, bb, KB


def prepare_params(w1, b1, w2, b2, ws, bs, *, compute_dtype=jnp.float32):
    """Repack PyTorch-layout (OIHW) UpResBlock weights for the fused kernel."""
    w1 = np.asarray(w1); ws = np.asarray(ws); w2 = np.asarray(w2)
    cdt = jnp.dtype(compute_dtype)
    C1, Cin = w1.shape[0], w1.shape[1]
    K = w1.shape[2]
    sub = 8 if cdt.itemsize == 4 else 16          # sublane tile of compute dtype
    assert C1 % sub == 0, "out_channel*4 must be a multiple of the sublane tile"
    Cin_p = -(-Cin // sub) * sub                   # pad Cin for aligned concat
    wa, ba = _pack_stage_a(w1, b1, ws, bs, Cin_p)
    wb, bb, KB = _pack_stage_b(w2, b2)
    assert wb.shape[0] == C1
    return {"wa": jnp.asarray(wa, cdt), "ba": jnp.asarray(ba),
            "wb": jnp.asarray(wb, cdt), "bb": jnp.asarray(bb),
            "K": int(K), "KB": int(KB), "Cin": int(Cin), "Cin_p": int(Cin_p),
            "C1": int(C1), "cdt": cdt}


# --------------------------------- wrapper --------------------------------- #

def up_res_block_forward(x, params):
    """UpResBlock forward.  x: (N, Cin, H, W) NCHW; params from prepare_params()."""
    N, Cin, H, W = x.shape
    K, KB = params["K"], params["KB"]
    Cin_p, C1, cdt = params["Cin_p"], params["C1"], params["cdt"]
    assert Cin == params["Cin"]
    Co = C1 // 4
    pA, pB = (K - 1) // 2, (KB - 1) // 2
    p = max(pA, pB)                       # common frame pad for both stages
    Wp, Hp = W + 2 * p, H + 2 * p
    Q = H * Wp                            # lanes of every MXU result tile

    # Per-row zero-padded, flattened input frame (replaces HBM im2col / masks).
    xbase = p                                           # front guard (>= p)
    LA = -(-(xbase + Hp * Wp + p) // 128) * 128         # 128-aligned total pitch
    xp = jnp.pad(x, ((0, 0), (0, Cin_p - Cin), (p, p), (p, p))).astype(cdt)
    x_flat = jnp.pad(xp.reshape(N, Cin_p, Hp * Wp),
                     ((0, 0), (0, 0), (xbase, LA - xbase - Hp * Wp)))

    # VMEM scratch frame for ReLU(conv1); valid rows start 128-aligned.
    yvalid = -(-(p * Wp + p) // 128) * 128
    Lscr = yvalid + Q + p * Wp + p

    kernel = functools.partial(_up_res_block_kernel, H=H, W=W, Wp=Wp, p=p,
                               K=K, KB=KB, pA=pA, pB=pB, C1=C1,
                               xbase=xbase, yvalid=yvalid)

    z = pl.pallas_call(
        kernel,
        out_shape=jax.ShapeDtypeStruct((N, C1, Q), x.dtype),
        grid=(N,),
        in_specs=[
            pl.BlockSpec((1, Cin_p, LA), lambda n: (n, 0, 0)),
            pl.BlockSpec((2 * C1, K * K * Cin_p), lambda n: (0, 0)),
            pl.BlockSpec((2 * C1, 1), lambda n: (0, 0)),
            pl.BlockSpec((C1, KB * KB * C1), lambda n: (0, 0)),
            pl.BlockSpec((C1, 1), lambda n: (0, 0)),
        ],
        out_specs=pl.BlockSpec((1, C1, Q), lambda n: (n, 0, 0)),
        scratch_shapes=[pltpu.VMEM((C1, Lscr), cdt)],
        compiler_params=pltpu.CompilerParams(
            dimension_semantics=("parallel",),     # megacore: needs N>=2 on v7x
            vmem_limit_bytes=32 * 1024 * 1024,
        ),
    )(x_flat, params["wa"], params["ba"], params["wb"], params["bb"])

    # Final PixelShuffle(2) + crop of the in-row pad columns: pure layout
    # plumbing in XLA (channel index of z is 4*co + 2*i + j, row pitch Wp).
    z = z.reshape(N, Co, 2, 2, H, Wp)[..., p:p + W]
    z = jnp.transpose(z, (0, 1, 4, 2, 5, 3))
    return z.reshape(N, Co, 2 * H, 2 * W)


# ---------------------------- pure-JAX reference ---------------------------- #

def _pixel_shuffle_nchw(y, r=2):
    N, C4, H, W = y.shape
    C = C4 // (r * r)
    y = y.reshape(N, C, r, r, H, W)
    y = jnp.transpose(y, (0, 1, 4, 2, 5, 3))
    return y.reshape(N, C, H * r, W * r)


def ref_forward(x, w1, b1, w2, b2, ws, bs):
    dn = ("NCHW", "OIHW", "NCHW")
    y = lax.conv_general_dilated(x, w1, (1, 1), "SAME", dimension_numbers=dn)
    y = y + b1[None, :, None, None]
    y = _pixel_shuffle_nchw(y, 2)
    y = jnp.maximum(y, 0.0)
    y = lax.conv_general_dilated(y, w2, (1, 1), "SAME", dimension_numbers=dn)
    y = y + b2[None, :, None, None]
    s = lax.conv_general_dilated(x, ws, (1, 1), "SAME", dimension_numbers=dn)
    s = s + bs[None, :, None, None]
    s = _pixel_shuffle_nchw(s, 2)
    return y + s


# ----------------------------------- main ----------------------------------- #

if __name__ == "__main__":
    in_channel, out_channel, K = 4, 4, 3
    N, H, W = 2, 16, 16

    key = jax.random.PRNGKey(0)
    k1, k2, k3, k4, k5, k6, kx = jax.random.split(key, 7)
    # PyTorch-layout (OIHW) weights
    w1 = jax.random.normal(k1, (out_channel * 4, in_channel, K, K), jnp.float32) * 0.1
    b1 = jax.random.normal(k2, (out_channel * 4,), jnp.float32) * 0.1
    w2 = jax.random.normal(k3, (out_channel, out_channel, K, K), jnp.float32) * 0.1
    b2 = jax.random.normal(k4, (out_channel,), jnp.float32) * 0.1
    ws = jax.random.normal(k5, (out_channel * 4, in_channel, 1, 1), jnp.float32) * 0.1
    bs = jax.random.normal(k6, (out_channel * 4,), jnp.float32) * 0.1
    x = jax.random.normal(kx, (N, in_channel, H, W), jnp.float32)  # NCHW like PyTorch

    params = prepare_params(w1, b1, w2, b2, ws, bs)   # f32 compute for the check
    out = up_res_block_forward(x, params)
    out = jax.block_until_ready(out)

    ref = ref_forward(x, w1, b1, w2, b2, ws, bs)
    assert out.shape == (N, out_channel, 2 * H, 2 * W), out.shape
    max_err = float(jnp.max(jnp.abs(out - ref)))
    assert jnp.allclose(out, ref, atol=5e-4, rtol=5e-4), max_err

    print("KERNEL_OK")
</pallas_src>

<mosaic_0001>
module attributes {stable_mosaic.version = 11 : i64} {
  func.func @_up_res_block_kernel(%arg0: i32, %arg1: memref<1x8x384xf32, #tpu.memory_space<vmem>>, %arg2: memref<32x72xf32, #tpu.memory_space<vmem>>, %arg3: memref<32x1xf32, #tpu.memory_space<vmem>>, %arg4: memref<16x144xf32, #tpu.memory_space<vmem>>, %arg5: memref<16x1xf32, #tpu.memory_space<vmem>>, %arg6: memref<1x16x288xf32, #tpu.memory_space<vmem>>, %arg7: memref<16x435xf32, #tpu.memory_space<vmem>>) attributes {dimension_semantics = [#tpu.dimension_semantics<parallel>], iteration_bounds = array<i64: 2>, scalar_prefetch = 0 : i64, scratch_operands = 1 : i64, tpu.core_type = #tpu.core_type<tc>, window_params = [{transform_indices = @transform_0, window_bounds = array<i64: 1, 8, 384>}, {pipeline_mode = #tpu.pipeline_mode<synchronous>, transform_indices = @transform_1, window_bounds = array<i64: 32, 72>}, {pipeline_mode = #tpu.pipeline_mode<synchronous>, transform_indices = @transform_2, window_bounds = array<i64: 32, 1>}, {pipeline_mode = #tpu.pipeline_mode<synchronous>, transform_indices = @transform_3, window_bounds = array<i64: 16, 144>}, {pipeline_mode = #tpu.pipeline_mode<synchronous>, transform_indices = @transform_4, window_bounds = array<i64: 16, 1>}, {transform_indices = @transform_5, window_bounds = array<i64: 1, 16, 288>}]} {
    %cst = arith.constant 0.000000e+00 : f32
    %0 = vector.broadcast %cst : f32 to vector<16x128xf32>
    %c0 = arith.constant 0 : index
    %c0_0 = arith.constant 0 : index
    %1 = vector.load %arg7[%c0, %c0_0] : memref<16x435xf32, #tpu.memory_space<vmem>>, vector<16x128xf32>
    tpu.vector_store %arg7[%c0, %c0_0], %0 {strides = array<i32>} : memref<16x435xf32, #tpu.memory_space<vmem>>, vector<16x128xf32>,
    %cst_1 = arith.constant 0.000000e+00 : f32
    %2 = vector.broadcast %cst_1 : f32 to vector<16x19xf32>
    %c0_2 = arith.constant 0 : index
    %c416 = arith.constant 416 : index
    %3 = vector.load %arg7[%c0_2, %c416] : memref<16x435xf32, #tpu.memory_space<vmem>>, vector<16x19xf32>
    tpu.vector_store %arg7[%c0_2, %c416], %2 {strides = array<i32>} : memref<16x435xf32, #tpu.memory_space<vmem>>, vector<16x19xf32>,
    %c0_3 = arith.constant 0 : index
    %c0_4 = arith.constant 0 : index
    %c0_5 = arith.constant 0 : index
    %4 = vector.load %arg1[%c0_3, %c0_4, %c0_5] : memref<1x8x384xf32, #tpu.memory_space<vmem>>, vector<1x8x384xf32>
    %5 = vector.shape_cast %4 : vector<1x8x384xf32> to vector<8x384xf32>
    %6 = vector.extract_strided_slice %5 {offsets = [0, 0], sizes = [8, 288], strides = [1, 1]} : vector<8x384xf32> to vector<8x288xf32>
    %7 = vector.extract_strided_slice %5 {offsets = [0, 1], sizes = [8, 288], strides = [1, 1]} : vector<8x384xf32> to vector<8x288xf32>
    %8 = vector.extract_strided_slice %5 {offsets = [0, 2], sizes = [8, 288], strides = [1, 1]} : vector<8x384xf32> to vector<8x288xf32>
    %9 = vector.extract_strided_slice %5 {offsets = [0, 18], sizes = [8, 288], strides = [1, 1]} : vector<8x384xf32> to vector<8x288xf32>
    %10 = vector.extract_strided_slice %5 {offsets = [0, 19], sizes = [8, 288], strides = [1, 1]} : vector<8x384xf32> to vector<8x288xf32>
    %11 = vector.extract_strided_slice %5 {offsets = [0, 20], sizes = [8, 288], strides = [1, 1]} : vector<8x384xf32> to vector<8x288xf32>
    %12 = vector.extract_strided_slice %5 {offsets = [0, 36], sizes = [8, 288], strides = [1, 1]} : vector<8x384xf32> to vector<8x288xf32>
    %13 = vector.extract_strided_slice %5 {offsets = [0, 37], sizes = [8, 288], strides = [1, 1]} : vector<8x384xf32> to vector<8x288xf32>
    %14 = vector.extract_strided_slice %5 {offsets = [0, 38], sizes = [8, 288], strides = [1, 1]} : vector<8x384xf32> to vector<8x288xf32>
    %15 = tpu.concatenate %6, %7, %8, %9, %10, %11, %12, %13, %14 in 0 : vector<8x288xf32>, vector<8x288xf32>, vector<8x288xf32>, vector<8x288xf32>, vector<8x288xf32>, vector<8x288xf32>, vector<8x288xf32>, vector<8x288xf32>, vector<8x288xf32> -> vector<72x288xf32>
    %c0_6 = arith.constant 0 : index
    %c0_7 = arith.constant 0 : index
    %16 = vector.load %arg2[%c0_6, %c0_7] : memref<32x72xf32, #tpu.memory_space<vmem>>, vector<32x72xf32>
    %cst_8 = arith.constant dense<0.000000e+00> : vector<32x288xf32>
    %17 = tpu.matmul %16, %15, %cst_8 {dimension_numbers = #tpu.dot_dimension_numbers<[1], [0], [0], [1], [0, 0, 1, 1], [], []>} : vector<32x72xf32>, vector<72x288xf32>, vector<32x288xf32> -> vector<32x288xf32>
    %c0_9 = arith.constant 0 : index
    %c0_10 = arith.constant 0 : index
    %18 = vector.load %arg3[%c0_9, %c0_10] : memref<32x1xf32, #tpu.memory_space<vmem>>, vector<32x1xf32>
    %19 = vector.broadcast %18 : vector<32x1xf32> to vector<32x288xf32>
    %20 = arith.addf %17, %19 : vector<32x288xf32>
    %21 = vector.extract_strided_slice %20 {offsets = [0, 0], sizes = [16, 288], strides = [1, 1]} : vector<32x288xf32> to vector<16x288xf32>
    %cst_11 = arith.constant 0.000000e+00 : f32
    %22 = vector.broadcast %cst_11 : f32 to vector<16x288xf32>
    %23 = arith.maximumf %21, %22 : vector<16x288xf32>
    %24 = vector.extract_strided_slice %20 {offsets = [16, 0], sizes = [16, 288], strides = [1, 1]} : vector<32x288xf32> to vector<16x288xf32>
    %25 = tpu.iota {dimensions = array<i32: 1>} : vector<1x288xi32>
    %c18_i32 = arith.constant 18 : i32
    %c0_i32 = arith.constant 0 : i32
    %26 = arith.cmpi eq, %c18_i32, %c0_i32 : i32
    %c1_i32 = arith.constant 1 : i32
    %27 = arith.select %26, %c1_i32, %c18_i32 : i32
    %28 = vector.broadcast %27 : i32 to vector<1x288xi32>
    %29 = arith.remsi %25, %28 : vector<1x288xi32>
    %c0_i32_12 = arith.constant 0 : i32
    %30 = vector.broadcast %c0_i32_12 : i32 to vector<1x288xi32>
    %31 = arith.cmpi ne, %29, %30 : vector<1x288xi32>
    %c0_i32_13 = arith.constant 0 : i32
    %32 = vector.broadcast %c0_i32_13 : i32 to vector<1x288xi32>
    %33 = arith.cmpi slt, %29, %32 : vector<1x288xi32>
    %c0_i32_14 = arith.constant 0 : i32
    %34 = arith.cmpi slt, %27, %c0_i32_14 : i32
    %35 = vector.broadcast %34 : i1 to vector<1x288xi1>
    %36 = vector.broadcast %35 : vector<1x288xi1> to vector<1x288xi1>
    %37 = arith.xori %33, %36 : vector<1x288xi1>
    %38 = arith.andi %37, %31 : vector<1x288xi1>
    %39 = vector.broadcast %27 : i32 to vector<1x288xi32>
    %40 = arith.addi %29, %39 : vector<1x288xi32>
    %41 = arith.select %38, %40, %29 : vector<1x288xi1>, vector<1x288xi32>
    %c1_i32_15 = arith.constant 1 : i32
    %42 = vector.broadcast %c1_i32_15 : i32 to vector<1x288xi32>
    %43 = arith.cmpi sge, %41, %42 : vector<1x288xi32>
    %c17_i32 = arith.constant 17 : i32
    %44 = vector.broadcast %c17_i32 : i32 to vector<1x288xi32>
    %45 = arith.cmpi slt, %41, %44 : vector<1x288xi32>
    %46 = arith.andi %43, %45 : vector<1x288xi1>
    %cst_16 = arith.constant 0.000000e+00 : f32
    %47 = vector.shape_cast %46 : vector<1x288xi1> to vector<1x288xi1>
    %48 = vector.broadcast %47 : vector<1x288xi1> to vector<16x288xi1>
    %49 = vector.broadcast %cst_16 : f32 to vector<16x288xf32>
    %50 = arith.select %48, %23, %49 : vector<16x288xi1>, vector<16x288xf32>
    %c0_17 = arith.constant 0 : index
    %c128 = arith.constant 128 : index
    %51 = vector.load %arg7[%c0_17, %c128] : memref<16x435xf32, #tpu.memory_space<vmem>>, vector<16x288xf32>
    tpu.vector_store %arg7[%c0_17, %c128], %50 {strides = array<i32>} : memref<16x435xf32, #tpu.memory_space<vmem>>, vector<16x288xf32>,
    %c0_18 = arith.constant 0 : index
    %c0_19 = arith.constant 0 : index
    %52 = vector.load %arg7[%c0_18, %c0_19] : memref<16x435xf32, #tpu.memory_space<vmem>>, vector<16x435xf32>
    %53 = vector.extract_strided_slice %52 {offsets = [0, 109], sizes = [16, 288], strides = [1, 1]} : vector<16x435xf32> to vector<16x288xf32>
    %54 = vector.extract_strided_slice %52 {offsets = [0, 110], sizes = [16, 288], strides = [1, 1]} : vector<16x435xf32> to vector<16x288xf32>
    %55 = vector.extract_strided_slice %52 {offsets = [0, 111], sizes = [16, 288], strides = [1, 1]} : vector<16x435xf32> to vector<16x288xf32>
    %56 = vector.extract_strided_slice %52 {offsets = [0, 127], sizes = [16, 288], strides = [1, 1]} : vector<16x435xf32> to vector<16x288xf32>
    %57 = vector.extract_strided_slice %52 {offsets = [0, 128], sizes = [16, 288], strides = [1, 1]} : vector<16x435xf32> to vector<16x288xf32>
    %58 = vector.extract_strided_slice %52 {offsets = [0, 129], sizes = [16, 288], strides = [1, 1]} : vector<16x435xf32> to vector<16x288xf32>
    %59 = vector.extract_strided_slice %52 {offsets = [0, 145], sizes = [16, 288], strides = [1, 1]} : vector<16x435xf32> to vector<16x288xf32>
    %60 = vector.extract_strided_slice %52 {offsets = [0, 146], sizes = [16, 288], strides = [1, 1]} : vector<16x435xf32> to vector<16x288xf32>
    %61 = vector.extract_strided_slice %52 {offsets = [0, 147], sizes = [16, 288], strides = [1, 1]} : vector<16x435xf32> to vector<16x288xf32>
    %62 = tpu.concatenate %53, %54, %55, %56, %57, %58, %59, %60, %61 in 0 : vector<16x288xf32>, vector<16x288xf32>, vector<16x288xf32>, vector<16x288xf32>, vector<16x288xf32>, vector<16x288xf32>, vector<16x288xf32>, vector<16x288xf32>, vector<16x288xf32> -> vector<144x288xf32>
    %c0_20 = arith.constant 0 : index
    %c0_21 = arith.constant 0 : index
    %63 = vector.load %arg4[%c0_20, %c0_21] : memref<16x144xf32, #tpu.memory_space<vmem>>, vector<16x144xf32>
    %cst_22 = arith.constant dense<0.000000e+00> : vector<16x288xf32>
    %64 = tpu.matmul %63, %62, %cst_22 {dimension_numbers = #tpu.dot_dimension_numbers<[1], [0], [0], [1], [0, 0, 1, 1], [], []>} : vector<16x144xf32>, vector<144x288xf32>, vector<16x288xf32> -> vector<16x288xf32>
    %c0_23 = arith.constant 0 : index
    %c0_24 = arith.constant 0 : index
    %65 = vector.load %arg5[%c0_23, %c0_24] : memref<16x1xf32, #tpu.memory_space<vmem>>, vector<16x1xf32>
    %66 = vector.broadcast %65 : vector<16x1xf32> to vector<16x288xf32>
    %67 = arith.addf %64, %66 : vector<16x288xf32>
    %68 = arith.addf %67, %24 : vector<16x288xf32>
    %c0_25 = arith.constant 0 : index
    %c0_26 = arith.constant 0 : index
    %c0_27 = arith.constant 0 : index
    %69 = vector.load %arg6[%c0_25, %c0_26, %c0_27] : memref<1x16x288xf32, #tpu.memory_space<vmem>>, vector<1x16x288xf32>
    %70 = vector.shape_cast %69 : vector<1x16x288xf32> to vector<16x288xf32>
    %71 = vector.shape_cast %68 : vector<16x288xf32> to vector<1x16x288xf32>
    tpu.vector_store %arg6[%c0_25, %c0_26, %c0_27], %71 {strides = array<i32>} : memref<1x16x288xf32, #tpu.memory_space<vmem>>, vector<1x16x288xf32>,
    return
  }
  func.func @transform_0(%arg0: i32) -> (i32, i32, i32) {
    %c0_i32 = arith.constant 0 : i32
    %c0_i32_0 = arith.constant 0 : i32
    %c0_i32_1 = arith.constant 0 : i32
    return %arg0, %c0_i32, %c0_i32_0 : i32, i32, i32
  }
  func.func @transform_1(%arg0: i32) -> (i32, i32) {
    %c0_i32 = arith.constant 0 : i32
    %c0_i32_0 = arith.constant 0 : i32
    %c0_i32_1 = arith.constant 0 : i32
    return %c0_i32, %c0_i32_0 : i32, i32
  }
  func.func @transform_2(%arg0: i32) -> (i32, i32) {
    %c0_i32 = arith.constant 0 : i32
    %c0_i32_0 = arith.constant 0 : i32
    %c0_i32_1 = arith.constant 0 : i32
    return %c0_i32, %c0_i32_0 : i32, i32
  }
  func.func @transform_3(%arg0: i32) -> (i32, i32) {
    %c0_i32 = arith.constant 0 : i32
    %c0_i32_0 = arith.constant 0 : i32
    %c0_i32_1 = arith.constant 0 : i32
    return %c0_i32, %c0_i32_0 : i32, i32
  }
  func.func @transform_4(%arg0: i32) -> (i32, i32) {
    %c0_i32 = arith.constant 0 : i32
    %c0_i32_0 = arith.constant 0 : i32
    %c0_i32_1 = arith.constant 0 : i32
    return %c0_i32, %c0_i32_0 : i32, i32
  }
  func.func @transform_5(%arg0: i32) -> (i32, i32, i32) {
    %c0_i32 = arith.constant 0 : i32
    %c0_i32_0 = arith.constant 0 : i32
    %c0_i32_1 = arith.constant 0 : i32
    return %arg0, %c0_i32, %c0_i32_0 : i32, i32, i32
  }
}

</mosaic_0001>

<llo_original>
// kernel: tpu_custom_call.1
$region0: #{tpu_custom_call.1}
  #allocation0 [shape = 'u32[]', space=smem, size = 0x4, offset = 0x4, fixed_abs, tag = 'smem constant byte address 0x4 - core index']
  #allocation1 [shape = 'u32[72,128]{1,0:T(1,128)}', space=vmem, size = 0x9000, scoped, tag = 'internal scratch']
  #allocation2 [shape = 'f32[16,435]{1,0:T(8,128)}', space=vmem, size = 0x8000, scoped, tag = 'scratch operand']
  %s0 = inlined_call_operand.vmem [shape: f32[2,8,384], index: 0, kind: input, shape index: {}]
  %s1 = inlined_call_operand.hbm [shape: f32[32,72], index: 1, kind: input, shape index: {}]
  %s2 = inlined_call_operand.vmem [shape: f32[32,1], index: 2, kind: input, shape index: {}]
  %s3 = inlined_call_operand.hbm [shape: f32[16,144], index: 3, kind: input, shape index: {}]
  %s4 = inlined_call_operand.vmem [shape: f32[16,1], index: 4, kind: input, shape index: {}]
  %s5 = inlined_call_operand.hbm [shape: f32[2,16,288], index: 5, kind: output, shape index: {}]
  %s6 = sld [smem:[#allocation0]]
  $region61: #{tpu_custom_call.1} parent=0
    _
  %s8 = ssub.s32 1, %s6
  %s9 = scalar_select 0, %s8, %s6
  $region1: #{tpu_custom_call.1} parent=0
    #allocation3 [shape = 'u8[16384]{0}', space=vmem, size = 0x4000, scoped, tag = 'input window, operand 1, single buffered']
    #allocation4 [shape = 's32[2]{0}', space=sflag, size = 0x8, scoped, tag = 'scoped memory for tpu_custom_call.1']
    #allocation5 [shape = 's32[2]{0}', space=sflag, size = 0x8, scoped, tag = 'scoped memory for tpu_custom_call.1']
    #allocation6 [shape = 'u8[16384]{0}', space=vmem, size = 0x4000, scoped, tag = 'input window, operand 3, single buffered']
    #allocation7 [shape = 's32[1]{0}', space=sflag, size = 0x4, scoped, tag = 'scoped memory for tpu_custom_call.1']
    #allocation8 [shape = 'u8[49152]{0}', space=vmem, size = 0xc000, scoped, tag = 'output window, operand 0']
    %10 = vsyncpa [#allocation4], 0
    %11 = vsyncpa [#allocation7], 0
    %12 = vsyncpa [#allocation5], 0
    %s13 = scalar_lea.sflag [#allocation5], 1
    %14 = vsyncpa %s13, 0
    loop: start=0, step=1, limit=4
    $region2: #{tpu_custom_call.1} parent=1 // loop_pre_header
      _
    $region3: #{tpu_custom_call.1} parent=1 // loop_header
      %s16 = sphi 0, %s20
      %p17 = scmp.ge.s32.totalorder %s16, 4
      %s26 = sphi 0, %s28
      %s29 = sphi 0, %s26
      %s30 = sphi 0, %s29
      %s46 = sphi 0, %s30
      %s50 = sphi 0, %s50
      %s52 = sphi 0, %s50
      %s53 = sphi 0, %s52
      %s67 = sphi 0, %s53
      %s71 = sphi 0, %s71
      %s73 = sphi 0, %s71
      %s74 = sphi 0, %s73
      %s88 = sphi 0, %s74
      %s92 = sphi 0, %s92
      %s94 = sphi 0, %s92
      %s95 = sphi 0, %s94
      %s109 = sphi 0, %s95
      %s113 = sphi 0, %s113
      %s115 = sphi 0, %s113
      %s116 = sphi 0, %s115
      %s130 = sphi 0, %s116
      %s136 = sphi 0, %s138
      %s139 = sphi 0, %s136
      %s140 = sphi 0, %s139
      %s156 = sphi 0, %s140
    $region4: #{tpu_custom_call.1} parent=1 // loop_header_branch
      %19 = sbr.rel (%p17) target = $region8
    $region5: #{tpu_custom_call.1} parent=1 // loop_body
      %s21 = ssub.s32 %s16, 1
      %s22 = ssub.s32 %s16, 2
      %s23 = sadd.s32 %s16, 1
      %s24 = ssub.s32 %s16, %s23
      %p25 = scmp.eq.s32.totalorder %s24, 0
      %s27 = sadd.s32 %s26, 1
      %s28 = scalar_select %p25, %s26, %s27
      %p31 = pneg %p25
      %p32 = scmp.eq.s32.totalorder %s16, 1
      %p33 = por %p31, %p32
      %p34 = scmp.ne.s32.totalorder %s26, %s29
      %p35 = scmp.eq.s32.totalorder %s16, 0
      %p36 = por %p34, %p35
      %p37 = scmp.ne.s32.totalorder %s26, %s29
      %p38 = scmp.eq.s32.totalorder %s21, 1
      %p39 = por %p37, %p38
      %p40 = scmp.ne.s32.totalorder %s29, %s30
      %p41 = scmp.eq.s32.totalorder %s21, 0
      %p42 = por %p40, %p41
      %p43 = scmp.ne.s32.totalorder %s29, %s30
      %p44 = scmp.eq.s32.totalorder %s22, 1
      %p45 = por %p43, %p44
      %p47 = scmp.ne.s32.totalorder %s30, %s46
      %p48 = scmp.eq.s32.totalorder %s22, 0
      %p49 = por %p47, %p48
      %s51 = sadd.s32 %s50, 1
      %p54 = scmp.eq.s32.totalorder %s16, 1
      %p55 = scmp.ne.s32.totalorder %s50, %s52
      %p56 = scmp.eq.s32.totalorder %s16, 0
      %p57 = por %p55, %p56
      %p58 = scmp.ne.s32.totalorder %s50, %s52
      %p59 = scmp.eq.s32.totalorder %s21, 1
      %p60 = por %p58, %p59
      %p61 = scmp.ne.s32.totalorder %s52, %s53
      %p62 = scmp.eq.s32.totalorder %s21, 0
      %p63 = por %p61, %p62
      %p64 = scmp.ne.s32.totalorder %s52, %s53
      %p65 = scmp.eq.s32.totalorder %s22, 1
      %p66 = por %p64, %p65
      %p68 = scmp.ne.s32.totalorder %s53, %s67
      %p69 = scmp.eq.s32.totalorder %s22, 0
      %p70 = por %p68, %p69
      %s72 = sadd.s32 %s71, 1
      %p75 = scmp.eq.s32.totalorder %s16, 1
      %p76 = scmp.ne.s32.totalorder %s71, %s73
      %p77 = scmp.eq.s32.totalorder %s16, 0
      %p78 = por %p76, %p77
      %p79 = scmp.ne.s32.totalorder %s71, %s73
      %p80 = scmp.eq.s32.totalorder %s21, 1
      %p81 = por %p79, %p80
      %p82 = scmp.ne.s32.totalorder %s73, %s74
      %p83 = scmp.eq.s32.totalorder %s21, 0
      %p84 = por %p82, %p83
      %p85 = scmp.ne.s32.totalorder %s73, %s74
      %p86 = scmp.eq.s32.totalorder %s22, 1
      %p87 = por %p85, %p86
      %p89 = scmp.ne.s32.totalorder %s74, %s88
      %p90 = scmp.eq.s32.totalorder %s22, 0
      %p91 = por %p89, %p90
      %s93 = sadd.s32 %s92, 1
      %p96 = scmp.eq.s32.totalorder %s16, 1
      %p97 = scmp.ne.s32.totalorder %s92, %s94
      %p98 = scmp.eq.s32.totalorder %s16, 0
      %p99 = por %p97, %p98
      %p100 = scmp.ne.s32.totalorder %s92, %s94
      %p101 = scmp.eq.s32.totalorder %s21, 1
      %p102 = por %p100, %p101
      %p103 = scmp.ne.s32.totalorder %s94, %s95
      %p104 = scmp.eq.s32.totalorder %s21, 0
      %p105 = por %p103, %p104
      %p106 = scmp.ne.s32.totalorder %s94, %s95
      %p107 = scmp.eq.s32.totalorder %s22, 1
      %p108 = por %p106, %p107
      %p110 = scmp.ne.s32.totalorder %s95, %s109
      %p111 = scmp.eq.s32.totalorder %s22, 0
      %p112 = por %p110, %p111
      %s114 = sadd.s32 %s113, 1
      %p117 = scmp.eq.s32.totalorder %s16, 1
      %p118 = scmp.ne.s32.totalorder %s113, %s115
      %p119 = scmp.eq.s32.totalorder %s16, 0
      %p120 = por %p118, %p119
      %p121 = scmp.ne.s32.totalorder %s113, %s115
      %p122 = scmp.eq.s32.totalorder %s21, 1
      %p123 = por %p121, %p122
      %p124 = scmp.ne.s32.totalorder %s115, %s116
      %p125 = scmp.eq.s32.totalorder %s21, 0
      %p126 = por %p124, %p125
      %p127 = scmp.ne.s32.totalorder %s115, %s116
      %p128 = scmp.eq.s32.totalorder %s22, 1
      %p129 = por %p127, %p128
      %p131 = scmp.ne.s32.totalorder %s116, %s130
      %p132 = scmp.eq.s32.totalorder %s22, 0
      %p133 = por %p131, %p132
      %s134 = ssub.s32 %s16, %s23
      %p135 = scmp.eq.s32.totalorder %s134, 0
      %s137 = sadd.s32 %s136, 1
      %s138 = scalar_select %p135, %s136, %s137
      %p141 = pneg %p135
      %p142 = scmp.eq.s32.totalorder %s16, 1
      %p143 = por %p141, %p142
      %p144 = scmp.ne.s32.totalorder %s136, %s139
      %p145 = scmp.eq.s32.totalorder %s16, 0
      %p146 = por %p144, %p145
      %p147 = scmp.ne.s32.totalorder %s136, %s139
      %p148 = scmp.eq.s32.totalorder %s21, 1
      %p149 = por %p147, %p148
      %p150 = scmp.ne.s32.totalorder %s139, %s140
      %p151 = scmp.eq.s32.totalorder %s21, 0
      %p152 = por %p150, %p151
      %p153 = scmp.ne.s32.totalorder %s139, %s140
      %p154 = scmp.eq.s32.totalorder %s22, 1
      %p155 = por %p153, %p154
      %p157 = scmp.ne.s32.totalorder %s140, %s156
      %p158 = scmp.eq.s32.totalorder %s22, 0
      %p159 = por %p157, %p158
      %p160 = scmp.le.s32.totalorder 1, %s16
      %p161 = scmp.lt.s32.totalorder %s16, 3
      %p162 = pnand %p160, %p161
      %p163 = pneg %p162
      // Predicated region
      $region9: #{tpu_custom_call.1} parent=5 // pred_check
        _
      $region10: #{tpu_custom_call.1} parent=5 // pred_check_branch
        %165 = sbr.rel (%p162) target = $region12
      $region11: #{tpu_custom_call.1} parent=5 // pred_region
        %s166 = ssub.s32 %s16, 1
        // Predicated region
        $region13: #{tpu_custom_call.1} parent=11 // pred_check
          %p167 = pneg %p63
        $region14: #{tpu_custom_call.1} parent=11 // pred_check_branch
          %169 = sbr.rel (%p167) target = $region16
        $region15: #{tpu_custom_call.1} parent=11 // pred_region
          %171 = vsyncadd [#allocation4], 0
          %s172 = sshll.u32 %s1, 4
          %s173 = int_to_ptr.hbm [resolvable:$true] %s172
          %s174 = sshll.u32 [#allocation3], 4
          %s175 = int_to_ptr.vmem [resolvable:$true] %s174
          %180 = dma.hbm_to_vmem [thread:$0]  %s173, 512, %s175, [#allocation4], 128, 128, 8
        $region16: #{tpu_custom_call.1} parent=11 // pred_fallthru
          _
        // Predicated region
        $region17: #{tpu_custom_call.1} parent=11 // pred_check
          %p181 = pneg %p84
        $region18: #{tpu_custom_call.1} parent=11 // pred_check_branch
          %183 = sbr.rel (%p181) target = $region20
        $region19: #{tpu_custom_call.1} parent=11 // pred_region
          _
        $region20: #{tpu_custom_call.1} parent=11 // pred_fallthru
          _
        // Predicated region
        $region21: #{tpu_custom_call.1} parent=11 // pred_check
          %p184 = pneg %p105
        $region22: #{tpu_custom_call.1} parent=11 // pred_check_branch
          %186 = sbr.rel (%p184) target = $region24
        $region23: #{tpu_custom_call.1} parent=11 // pred_region
          %188 = vsyncadd [#allocation7], 0
          %s189 = sshll.u32 %s3, 4
          %s190 = int_to_ptr.hbm [resolvable:$true] %s189
          %s191 = sshll.u32 [#allocation6], 4
          %s192 = int_to_ptr.vmem [resolvable:$true] %s191
          %197 = dma.hbm_to_vmem [thread:$0]  %s190, 512, %s192, [#allocation7], 256, 256, 16
        $region24: #{tpu_custom_call.1} parent=11 // pred_fallthru
          _
        // Predicated region
        $region25: #{tpu_custom_call.1} parent=11 // pred_check
          %p198 = pneg %p126
        $region26: #{tpu_custom_call.1} parent=11 // pred_check_branch
          %200 = sbr.rel (%p198) target = $region28
        $region27: #{tpu_custom_call.1} parent=11 // pred_region
          _
        $region28: #{tpu_custom_call.1} parent=11 // pred_fallthru
          _
      $region12: #{tpu_custom_call.1} parent=5 // pred_fallthru
        _
      %p201 = scmp.lt.s32.totalorder %s16, 2
      // Predicated region
      $region29: #{tpu_custom_call.1} parent=5 // pred_check
        %p202 = pneg %p201
      $region30: #{tpu_custom_call.1} parent=5 // pred_check_branch
        %204 = sbr.rel (%p202) target = $region32
      $region31: #{tpu_custom_call.1} parent=5 // pred_region
        // Predicated region
        $region33: #{tpu_custom_call.1} parent=31 // pred_check
          %p205 = pneg %p36
        $region34: #{tpu_custom_call.1} parent=31 // pred_check_branch
          %207 = sbr.rel (%p205) target = $region36
        $region35: #{tpu_custom_call.1} parent=31 // pred_region
          %p208 = scmp.lt.s32.totalorder %s16, 1
          %s209 = scalar_select %p208, %s16, 1
          %s210 = smul.addr %s209, 3
          %s211 = smul.addr %s210, 8
          %s212 = scalar_lea.vmem %s0, %s211
        $region36: #{tpu_custom_call.1} parent=31 // pred_fallthru
          _
      $region32: #{tpu_custom_call.1} parent=5 // pred_fallthru
        _
      %p213 = scmp.le.s32.totalorder 1, %s16
      %p214 = scmp.lt.s32.totalorder %s16, 3
      %p215 = pnand %p213, %p214
      %p216 = pneg %p215
      // Predicated region
      $region37: #{tpu_custom_call.1} parent=5 // pred_check
        _
      $region38: #{tpu_custom_call.1} parent=5 // pred_check_branch
        %218 = sbr.rel (%p215) target = $region40
      $region39: #{tpu_custom_call.1} parent=5 // pred_region
        %s219 = ssub.s32 %s16, 1
        // Predicated region
        $region41: #{tpu_custom_call.1} parent=39 // pred_check
          %p220 = pneg %p63
        $region42: #{tpu_custom_call.1} parent=39 // pred_check_branch
          %222 = sbr.rel (%p220) target = $region44
        $region43: #{tpu_custom_call.1} parent=39 // pred_region
          %224 = dma.done [#allocation4], 512
        $region44: #{tpu_custom_call.1} parent=39 // pred_fallthru
          _
        // Predicated region
        $region45: #{tpu_custom_call.1} parent=39 // pred_check
          %p225 = pneg %p105
        $region46: #{tpu_custom_call.1} parent=39 // pred_check_branch
          %227 = sbr.rel (%p225) target = $region48
        $region47: #{tpu_custom_call.1} parent=39 // pred_region
          %229 = dma.done [#allocation7], 512
        $region48: #{tpu_custom_call.1} parent=39 // pred_fallthru
          _
        %p230 = scmp.lt.s32.totalorder %s21, 1
        %s231 = scalar_select %p230, %s21, 1
        %s232 = smul.addr %s231, 3
        %s233 = smul.addr %s232, 8
        %s234 = scalar_lea.vmem %s0, %s233
        %p235 = pneg %p42
        %p236 = pneg %p39
        %p237 = pneg %p63
        %p238 = pneg %p60
        %p239 = pneg %p84
        %p240 = pneg %p81
        %p241 = pneg %p105
        %p242 = pneg %p102
        %p243 = pneg %p126
        %p244 = pneg %p123
        %p245 = pneg %p152
        %p246 = pneg %p149
        %s247 = sand.u32 %s139, 1
        %s248 = scalar_lea.sflag [#allocation5], %s247
        %s249 = sand.u32 %s139, 1
        %s250 = smul.addr %s249, 48
        %s251 = scalar_lea.vmem [#allocation8], %s250
        %p252 = scmp.lt.s32.totalorder %s21, 1
        %s253 = scalar_select %p252, %s21, 1
        %s254 = smul.addr %s253, 3
        %s255 = smul.addr %s254, 8
        %s256 = scalar_lea.vmem %s0, %s255
        %257 = vst [vmem:[#allocation2] sm:$0xff] 0.0
        %258 = vst [vmem:[#allocation2 + $0x20] sm:$0xff] 0.0
        %vm259 = vcmask 417024
        %260 = vst.msk [vmem:[#allocation2 + $0x18] sm:$0xff] %vm259, 0.0
        %261 = vst.msk [vmem:[#allocation2 + $0x38] sm:$0xff] %vm259, 0.0
        %v262 = vld [vmem:[%s256] sm:$0xff]
        %v263 = vld [vmem:[%s256 + $0x8] sm:$0xff]
        %v264 = vld [vmem:[%s256 + $0x10] sm:$0xff]
        %268 = vrot.lane.b32.xlu0 %v262, 127
        %v269 = vpop.permute.xlu0 %268
        %270 = vrot.lane.b32.xlu0 %v263, 127
        %v271 = vpop.permute.xlu0 %270
        %272 = vrot.lane.b32.xlu0 %v264, 127
        %v273 = vpop.permute.xlu0 %272
        %vm274 = vcmask 1039360
        %v275 = vsel %vm274, %v269, %v271
        %v276 = vsel %vm274, %v271, %v273
        %280 = vrot.lane.b32.xlu0 %v262, 126
        %v281 = vpop.permute.xlu0 %280
        %282 = vrot.lane.b32.xlu0 %v263, 126
        %v283 = vpop.permute.xlu0 %282
        %284 = vrot.lane.b32.xlu0 %v264, 126
        %v285 = vpop.permute.xlu0 %284
        %vm286 = vcmask 1031168
        %v287 = vsel %vm286, %v281, %v283
        %v288 = vsel %vm286, %v283, %v285
        %292 = vrot.lane.b32.xlu0 %v262, 110
        %v293 = vpop.permute.xlu0 %292
        %294 = vrot.lane.b32.xlu0 %v263, 110
        %v295 = vpop.permute.xlu0 %294
        %296 = vrot.lane.b32.xlu0 %v264, 110
        %v297 = vpop.permute.xlu0 %296
        %vm298 = vcmask 900096
        %v299 = vsel %vm298, %v293, %v295
        %v300 = vsel %vm298, %v295, %v297
        %304 = vrot.lane.b32.xlu0 %v262, 109
        %v305 = vpop.permute.xlu0 %304
        %306 = vrot.lane.b32.xlu0 %v263, 109
        %v307 = vpop.permute.xlu0 %306
        %308 = vrot.lane.b32.xlu0 %v264, 109
        %v309 = vpop.permute.xlu0 %308
        %vm310 = vcmask 891904
        %v311 = vsel %vm310, %v305, %v307
        %v312 = vsel %vm310, %v307, %v309
        %316 = vrot.lane.b32.xlu0 %v262, 108
        %v317 = vpop.permute.xlu0 %316
        %318 = vrot.lane.b32.xlu0 %v263, 108
        %v319 = vpop.permute.xlu0 %318
        %320 = vrot.lane.b32.xlu0 %v264, 108
        %v321 = vpop.permute.xlu0 %320
        %vm322 = vcmask 883712
        %v323 = vsel %vm322, %v317, %v319
        %v324 = vsel %vm322, %v319, %v321
        %328 = vrot.lane.b32.xlu0 %v262, 92
        %v329 = vpop.permute.xlu0 %328
        %330 = vrot.lane.b32.xlu0 %v263, 92
        %v331 = vpop.permute.xlu0 %330
        %332 = vrot.lane.b32.xlu0 %v264, 92
        %v333 = vpop.permute.xlu0 %332
        %vm334 = vcmask 752640
        %v335 = vsel %vm334, %v329, %v331
        %v336 = vsel %vm334, %v331, %v333
        %340 = vrot.lane.b32.xlu0 %v262, 91
        %v341 = vpop.permute.xlu0 %340
        %342 = vrot.lane.b32.xlu0 %v263, 91
        %v343 = vpop.permute.xlu0 %342
        %344 = vrot.lane.b32.xlu0 %v264, 91
        %v345 = vpop.permute.xlu0 %344
        %vm346 = vcmask 744448
        %v347 = vsel %vm346, %v341, %v343
        %v348 = vsel %vm346, %v343, %v345
        %352 = vrot.lane.b32.xlu0 %v262, 90
        %v353 = vpop.permute.xlu0 %352
        %354 = vrot.lane.b32.xlu0 %v263, 90
        %v355 = vpop.permute.xlu0 %354
        %356 = vrot.lane.b32.xlu0 %v264, 90
        %v357 = vpop.permute.xlu0 %356
        %vm358 = vcmask 736256
        %v359 = vsel %vm358, %v353, %v355
        %v360 = vsel %vm358, %v355, %v357
        %v364 = vld [vmem:[#allocation3] sm:$0xff]
        %v365 = vld [vmem:[#allocation3 + $0x8] sm:$0xff]
        %v366 = vld [vmem:[#allocation3 + $0x10] sm:$0xff]
        %v367 = vld [vmem:[#allocation3 + $0x18] sm:$0xff]
        %v368 = vld [vmem:[%s2] sm:$0xff]
        %v369 = vld [vmem:[%s2 + $0x8] sm:$0xff]
        %v370 = vld [vmem:[%s2 + $0x10] sm:$0xff]
        %v371 = vld [vmem:[%s2 + $0x18] sm:$0xff]
        %373 = vset.pattern.permute.xlu0 0
        %374 = vperm.xlu0 %373, %v368
        %v375 = vpop.permute.xlu0 %374
        %378 = vset.pattern.permute.xlu0 0
        %379 = vperm.xlu0 %378, %v369
        %v380 = vpop.permute.xlu0 %379
        %383 = vset.pattern.permute.xlu0 0
        %384 = vperm.xlu0 %383, %v370
        %v385 = vpop.permute.xlu0 %384
        %388 = vset.pattern.permute.xlu0 0
        %389 = vperm.xlu0 %388, %v371
        %v390 = vpop.permute.xlu0 %389
        %vm392 = vcmask 588800
        %v394 = vsel %vm392, %v364, 0
        %v397 = vsel %vm392, %v365, 0
        %v400 = vsel %vm392, %v366, 0
        %v403 = vsel %vm392, %v367, 0
        %405 = vmatpush.msra.mxu0 0.0
        %406 = vmatpush.msra.mxu0 0.0
        %407 = vmatpush.msra.mxu0 0.0
        %408 = vmatpush.msra.mxu0 0.0
        %409 = vmatpush.msra.mxu0 0.0
        %410 = vmatpush.msra.mxu0 0.0
        %411 = vmatpush.msra.mxu0 0.0
        %412 = vmatpush.msra.mxu0 %v359
        %413 = vmatpush.msra.mxu0 %v347
        %414 = vmatpush.msra.mxu0 %v335
        %415 = vmatpush.msra.mxu0 %v323
        %416 = vmatpush.msra.mxu0 %v311
        %417 = vmatpush.msra.mxu0 %v299
        %418 = vmatpush.msra.mxu0 %v287
        %419 = vmatpush.msra.mxu0 %v275
        %420 = vmatpush.msra.mxu0 %v262
        %421 = vmatmul.f32.gmra.mxu0 %v394
        %v422 = vpop.f32.mrf.mxu0
        %v423 = vadd.f32 %v375, %v422
        %424 = vmatmul.f32.gmra.mxu0 %v397
        %v425 = vpop.f32.mrf.mxu0
        %v426 = vadd.f32 %v380, %v425
        %427 = vmatmul.f32.gmra.mxu0 %v400
        %v428 = vpop.f32.mrf.mxu0
        %v429 = vadd.f32 %v385, %v428
        %430 = vmatmul.f32.gmra.mxu0 %v403
        %v431 = vpop.f32.mrf.mxu0
        %v432 = vadd.f32 %v390, %v431
        %433 = vdwg.mxu0
        %434 = vmatpush.msra.mxu0 0.0
        %435 = vmatpush.msra.mxu0 0.0
        %436 = vmatpush.msra.mxu0 0.0
        %437 = vmatpush.msra.mxu0 0.0
        %438 = vmatpush.msra.mxu0 0.0
        %439 = vmatpush.msra.mxu0 0.0
        %440 = vmatpush.msra.mxu0 0.0
        %441 = vmatpush.msra.mxu0 %v360
        %442 = vmatpush.msra.mxu0 %v348
        %443 = vmatpush.msra.mxu0 %v336
        %444 = vmatpush.msra.mxu0 %v324
        %445 = vmatpush.msra.mxu0 %v312
        %446 = vmatpush.msra.mxu0 %v300
        %447 = vmatpush.msra.mxu0 %v288
        %448 = vmatpush.msra.mxu0 %v276
        %449 = vmatpush.msra.mxu0 %v263
        %450 = vmatmul.f32.gmra.mxu0 %v394
        %v451 = vpop.f32.mrf.mxu0
        %v452 = vadd.f32 %v375, %v451
        %453 = vmatmul.f32.gmra.mxu0 %v397
        %v454 = vpop.f32.mrf.mxu0
        %v455 = vadd.f32 %v380, %v454
        %456 = vmatmul.f32.gmra.mxu0 %v400
        %v457 = vpop.f32.mrf.mxu0
        %v458 = vadd.f32 %v385, %v457
        %459 = vmatmul.f32.gmra.mxu0 %v403
        %v460 = vpop.f32.mrf.mxu0
        %v461 = vadd.f32 %v390, %v460
        %462 = vdwg.mxu0
        %463 = vmatpush.msra.mxu0 0.0
        %464 = vmatpush.msra.mxu0 0.0
        %465 = vmatpush.msra.mxu0 0.0
        %466 = vmatpush.msra.mxu0 0.0
        %467 = vmatpush.msra.mxu0 0.0
        %468 = vmatpush.msra.mxu0 0.0
        %469 = vmatpush.msra.mxu0 0.0
        %470 = vmatpush.msra.mxu0 %v357
        %471 = vmatpush.msra.mxu0 %v345
        %472 = vmatpush.msra.mxu0 %v333
        %473 = vmatpush.msra.mxu0 %v321
        %474 = vmatpush.msra.mxu0 %v309
        %475 = vmatpush.msra.mxu0 %v297
        %476 = vmatpush.msra.mxu0 %v285
        %477 = vmatpush.msra.mxu0 %v273
        %478 = vmatpush.msra.mxu0 %v264
        %479 = vmatmul.f32.gmra.mxu0 %v394
        %v480 = vpop.f32.mrf.mxu0
        %v481 = vadd.f32 %v375, %v480
        %482 = vmatmul.f32.gmra.mxu0 %v397
        %v483 = vpop.f32.mrf.mxu0
        %v484 = vadd.f32 %v380, %v483
        %485 = vmatmul.f32.gmra.mxu0 %v400
        %v486 = vpop.f32.mrf.mxu0
        %v487 = vadd.f32 %v385, %v486
        %488 = vmatmul.f32.gmra.mxu0 %v403
        %v489 = vpop.f32.mrf.mxu0
        %v490 = vadd.f32 %v390, %v489
        %491 = vdwg.mxu0
        %v492 = vmax.f32 %v423, 0.0
        %v493 = vmax.f32 %v452, 0.0
        %v494 = vmax.f32 %v481, 0.0
        %v495 = vmax.f32 %v426, 0.0
        %v496 = vmax.f32 %v455, 0.0
        %v497 = vmax.f32 %v484, 0.0
        %v498 = vlaneseq
        %v499 = vand.u32 %v498, 127
        %v500 = vadd.s32 %v499, 128
        %v501 = vadd.s32 %v499, 256
        %vm502 = vcmp.lt.s32.totalorder %v499, 0
        %v503 = vsub.s32 0, %v499
        %v504 = vsel %vm502, %v503, %v499
        %v505 = vand.u32 %v504, 65535
        %v506 = vshrl.u32 %v504, 16
        %v508 = vmul.u32 %v505, 14564
        %v509 = vmul.u32 %v505, 58254
        %v510 = vmul.u32 %v506, 14564
        %v511 = vmul.u32 %v506, 58254
        %v512 = vshll.u32 %v509, 16
        %v513 = vshrl.u32 %v509, 16
        %v514 = vshll.u32 %v510, 16
        %v515 = vshrl.u32 %v510, 16
        %vm516 = vc.u32 %v508, %v512
        %v517 = vsel %vm516, 1, 0
        %v518 = vadd.s32 %v508, %v512
        %v519 = vadd.s32 %v511, %v517
        %vm520 = vc.u32 %v518, %v514
        %v521 = vsel %vm520, 1, 0
        %v522 = vadd.s32 %v518, %v514
        %v523 = vadd.s32 %v519, %v521
        %v524 = vadd.s32 %v523, %v513
        %v525 = vadd.s32 %v524, %v515
        %v526 = vshrl.u32 %v525, 4
        %v527 = vmul.u32 %v526, 18
        %v528 = vsub.s32 %v504, %v527
        %v529 = vsub.s32 0, %v528
        %v530 = vsel %vm502, %v529, %v528
        %vm531 = vcmp.lt.s32.totalorder %v500, 0
        %v532 = vsub.s32 0, %v500
        %v533 = vsel %vm531, %v532, %v500
        %v534 = vand.u32 %v533, 65535
        %v535 = vshrl.u32 %v533, 16
        %v537 = vmul.u32 %v534, 14564
        %v538 = vmul.u32 %v534, 58254
        %v539 = vmul.u32 %v535, 14564
        %v540 = vmul.u32 %v535, 58254
        %v541 = vshll.u32 %v538, 16
        %v542 = vshrl.u32 %v538, 16
        %v543 = vshll.u32 %v539, 16
        %v544 = vshrl.u32 %v539, 16
        %vm545 = vc.u32 %v537, %v541
        %v546 = vsel %vm545, 1, 0
        %v547 = vadd.s32 %v537, %v541
        %v548 = vadd.s32 %v540, %v546
        %vm549 = vc.u32 %v547, %v543
        %v550 = vsel %vm549, 1, 0
        %v551 = vadd.s32 %v547, %v543
        %v552 = vadd.s32 %v548, %v550
        %v553 = vadd.s32 %v552, %v542
        %v554 = vadd.s32 %v553, %v544
        %v555 = vshrl.u32 %v554, 4
        %v556 = vmul.u32 %v555, 18
        %v557 = vsub.s32 %v533, %v556
        %v558 = vsub.s32 0, %v557
        %v559 = vsel %vm531, %v558, %v557
        %vm560 = vcmp.lt.s32.totalorder %v501, 0
        %v561 = vsub.s32 0, %v501
        %v562 = vsel %vm560, %v561, %v501
        %v563 = vand.u32 %v562, 65535
        %v564 = vshrl.u32 %v562, 16
        %v566 = vmul.u32 %v563, 14564
        %v567 = vmul.u32 %v563, 58254
        %v568 = vmul.u32 %v564, 14564
        %v569 = vmul.u32 %v564, 58254
        %v570 = vshll.u32 %v567, 16
        %v571 = vshrl.u32 %v567, 16
        %v572 = vshll.u32 %v568, 16
        %v573 = vshrl.u32 %v568, 16
        %vm574 = vc.u32 %v566, %v570
        %v575 = vsel %vm574, 1, 0
        %v576 = vadd.s32 %v566, %v570
        %v577 = vadd.s32 %v569, %v575
        %vm578 = vc.u32 %v576, %v572
        %v579 = vsel %vm578, 1, 0
        %v580 = vadd.s32 %v576, %v572
        %v581 = vadd.s32 %v577, %v579
        %v582 = vadd.s32 %v581, %v571
        %v583 = vadd.s32 %v582, %v573
        %v584 = vshrl.u32 %v583, 4
        %v585 = vmul.u32 %v584, 18
        %v586 = vsub.s32 %v562, %v585
        %v587 = vsub.s32 0, %v586
        %v588 = vsel %vm560, %v587, %v586
        %vm589 = vcmp.ne.s32.totalorder %v530, 0
        %vm590 = vcmp.ne.s32.totalorder %v559, 0
        %vm591 = vcmp.ne.s32.totalorder %v588, 0
        %vm592 = vcmp.lt.s32.totalorder %v530, 0
        %vm593 = vcmp.lt.s32.totalorder %v559, 0
        %vm594 = vcmp.lt.s32.totalorder %v588, 0
        %vm595 = vmand %vm592, %vm589
        %vm596 = vmand %vm593, %vm590
        %vm597 = vmand %vm594, %vm591
        %v598 = vadd.s32 %v530, 18
        %v599 = vadd.s32 %v559, 18
        %v600 = vadd.s32 %v588, 18
        %v601 = vsel %vm595, %v598, %v530
        %v602 = vsel %vm596, %v599, %v559
        %v603 = vsel %vm597, %v600, %v588
        %vm604 = vcmp.ge.s32.totalorder %v601, 1
        %vm605 = vcmp.ge.s32.totalorder %v602, 1
        %vm606 = vcmp.ge.s32.totalorder %v603, 1
        %vm607 = vcmp.lt.s32.totalorder %v601, 17
        %vm608 = vcmp.lt.s32.totalorder %v602, 17
        %vm609 = vcmp.lt.s32.totalorder %v603, 17
        %vm610 = vmand %vm604, %vm607
        %vm611 = vmand %vm605, %vm608
        %vm612 = vmand %vm606, %vm609
        %v613 = vsel %vm610, 1, 0
        %v614 = vsel %vm611, 1, 0
        %v615 = vsel %vm612, 1, 0
        %vm616 = vcmp.eq.s32.totalorder %v613, 1
        %vm617 = vcmp.eq.s32.totalorder %v614, 1
        %vm618 = vcmp.eq.s32.totalorder %v615, 1
        %v619 = vsel %vm616, %v492, 0.0
        %v620 = vsel %vm617, %v493, 0.0
        %v621 = vsel %vm618, %v494, 0.0
        %v622 = vsel %vm616, %v495, 0.0
        %v623 = vsel %vm617, %v496, 0.0
        %v624 = vsel %vm618, %v497, 0.0
        %625 = vst [vmem:[#allocation2 + $0x8] sm:$0xff] %v619
        %626 = vst [vmem:[#allocation2 + $0x10] sm:$0xff] %v620
        %vm627 = vcmask 261120
        %628 = vst.msk [vmem:[#allocation2 + $0x18] sm:$0xff] %vm627, %v621
        %629 = vst [vmem:[#allocation2 + $0x28] sm:$0xff] %v622
        %630 = vst [vmem:[#allocation2 + $0x30] sm:$0xff] %v623
        %631 = vst.msk [vmem:[#allocation2 + $0x38] sm:$0xff] %vm627, %v624
        %v632 = vld [vmem:[#allocation2] sm:$0xff]
        %v633 = vld [vmem:[#allocation2 + $0x8] sm:$0xff]
        %v634 = vld [vmem:[#allocation2 + $0x10] sm:$0xff]
        %v635 = vld [vmem:[#allocation2 + $0x18] sm:$0xff]
        %v636 = vld [vmem:[#allocation2 + $0x20] sm:$0xff]
        %v637 = vld [vmem:[#allocation2 + $0x28] sm:$0xff]
        %v638 = vld [vmem:[#allocation2 + $0x30] sm:$0xff]
        %v639 = vld [vmem:[#allocation2 + $0x38] sm:$0xff]
        %648 = vrot.lane.b32.xlu0 %v632, 127
        %v649 = vpop.permute.xlu0 %648
        %650 = vrot.lane.b32.xlu0 %v633, 127
        %v651 = vpop.permute.xlu0 %650
        %652 = vrot.lane.b32.xlu0 %v634, 127
        %v653 = vpop.permute.xlu0 %652
        %654 = vrot.lane.b32.xlu0 %v635, 127
        %v655 = vpop.permute.xlu0 %654
        %656 = vrot.lane.b32.xlu0 %v636, 127
        %v657 = vpop.permute.xlu0 %656
        %658 = vrot.lane.b32.xlu0 %v637, 127
        %v659 = vpop.permute.xlu0 %658
        %660 = vrot.lane.b32.xlu0 %v638, 127
        %v661 = vpop.permute.xlu0 %660
        %662 = vrot.lane.b32.xlu0 %v639, 127
        %v663 = vpop.permute.xlu0 %662
        %v664 = vsel %vm274, %v649, %v651
        %v665 = vsel %vm274, %v651, %v653
        %v666 = vsel %vm274, %v653, %v655
        %v667 = vsel %vm274, %v657, %v659
        %v668 = vsel %vm274, %v659, %v661
        %v669 = vsel %vm274, %v661, %v663
        %670 = vrot.lane.b32.xlu0 %v632, 126
        %v671 = vpop.permute.xlu0 %670
        %672 = vrot.lane.b32.xlu0 %v633, 126
        %v673 = vpop.permute.xlu0 %672
        %674 = vrot.lane.b32.xlu0 %v634, 126
        %v675 = vpop.permute.xlu0 %674
        %676 = vrot.lane.b32.xlu0 %v635, 126
        %v677 = vpop.permute.xlu0 %676
        %678 = vrot.lane.b32.xlu0 %v636, 126
        %v679 = vpop.permute.xlu0 %678
        %680 = vrot.lane.b32.xlu0 %v637, 126
        %v681 = vpop.permute.xlu0 %680
        %682 = vrot.lane.b32.xlu0 %v638, 126
        %v683 = vpop.permute.xlu0 %682
        %684 = vrot.lane.b32.xlu0 %v639, 126
        %v685 = vpop.permute.xlu0 %684
        %v686 = vsel %vm286, %v671, %v673
        %v687 = vsel %vm286, %v673, %v675
        %v688 = vsel %vm286, %v675, %v677
        %v689 = vsel %vm286, %v679, %v681
        %v690 = vsel %vm286, %v681, %v683
        %v691 = vsel %vm286, %v683, %v685
        %692 = vrot.lane.b32.xlu0 %v632, 110
        %v693 = vpop.permute.xlu0 %692
        %694 = vrot.lane.b32.xlu0 %v633, 110
        %v695 = vpop.permute.xlu0 %694
        %696 = vrot.lane.b32.xlu0 %v634, 110
        %v697 = vpop.permute.xlu0 %696
        %698 = vrot.lane.b32.xlu0 %v635, 110
        %v699 = vpop.permute.xlu0 %698
        %700 = vrot.lane.b32.xlu0 %v636, 110
        %v701 = vpop.permute.xlu0 %700
        %702 = vrot.lane.b32.xlu0 %v637, 110
        %v703 = vpop.permute.xlu0 %702
        %704 = vrot.lane.b32.xlu0 %v638, 110
        %v705 = vpop.permute.xlu0 %704
        %706 = vrot.lane.b32.xlu0 %v639, 110
        %v707 = vpop.permute.xlu0 %706
        %v708 = vsel %vm298, %v693, %v695
        %v709 = vsel %vm298, %v695, %v697
        %v710 = vsel %vm298, %v697, %v699
        %v711 = vsel %vm298, %v701, %v703
        %v712 = vsel %vm298, %v703, %v705
        %v713 = vsel %vm298, %v705, %v707
        %714 = vrot.lane.b32.xlu0 %v633, 109
        %v715 = vpop.permute.xlu0 %714
        %716 = vrot.lane.b32.xlu0 %v634, 109
        %v717 = vpop.permute.xlu0 %716
        %718 = vrot.lane.b32.xlu0 %v635, 109
        %v719 = vpop.permute.xlu0 %718
        %720 = vrot.lane.b32.xlu0 %v637, 109
        %v721 = vpop.permute.xlu0 %720
        %722 = vrot.lane.b32.xlu0 %v638, 109
        %v723 = vpop.permute.xlu0 %722
        %724 = vrot.lane.b32.xlu0 %v639, 109
        %v725 = vpop.permute.xlu0 %724
        %v726 = vsel %vm310, %v715, %v717
        %v727 = vsel %vm310, %v717, %v719
        %v728 = vsel %vm310, %v721, %v723
        %v729 = vsel %vm310, %v723, %v725
        %730 = vrot.lane.b32.xlu0 %v633, 108
        %v731 = vpop.permute.xlu0 %730
        %732 = vrot.lane.b32.xlu0 %v634, 108
        %v733 = vpop.permute.xlu0 %732
        %734 = vrot.lane.b32.xlu0 %v635, 108
        %v735 = vpop.permute.xlu0 %734
        %736 = vrot.lane.b32.xlu0 %v637, 108
        %v737 = vpop.permute.xlu0 %736
        %738 = vrot.lane.b32.xlu0 %v638, 108
        %v739 = vpop.permute.xlu0 %738
        %740 = vrot.lane.b32.xlu0 %v639, 108
        %v741 = vpop.permute.xlu0 %740
        %v742 = vsel %vm322, %v731, %v733
        %v743 = vsel %vm322, %v733, %v735
        %v744 = vsel %vm322, %v737, %v739
        %v745 = vsel %vm322, %v739, %v741
        %746 = vrot.lane.b32.xlu0 %v633, 92
        %v747 = vpop.permute.xlu0 %746
        %748 = vrot.lane.b32.xlu0 %v634, 92
        %v749 = vpop.permute.xlu0 %748
        %750 = vrot.lane.b32.xlu0 %v635, 92
        %v751 = vpop.permute.xlu0 %750
        %752 = vrot.lane.b32.xlu0 %v637, 92
        %v753 = vpop.permute.xlu0 %752
        %754 = vrot.lane.b32.xlu0 %v638, 92
        %v755 = vpop.permute.xlu0 %754
        %756 = vrot.lane.b32.xlu0 %v639, 92
        %v757 = vpop.permute.xlu0 %756
        %v758 = vsel %vm334, %v747, %v749
        %v759 = vsel %vm334, %v749, %v751
        %v760 = vsel %vm334, %v753, %v755
        %v761 = vsel %vm334, %v755, %v757
        %762 = vrot.lane.b32.xlu0 %v633, 91
        %v763 = vpop.permute.xlu0 %762
        %764 = vrot.lane.b32.xlu0 %v634, 91
        %v765 = vpop.permute.xlu0 %764
        %766 = vrot.lane.b32.xlu0 %v635, 91
        %v767 = vpop.permute.xlu0 %766
        %768 = vrot.lane.b32.xlu0 %v637, 91
        %v769 = vpop.permute.xlu0 %768
        %770 = vrot.lane.b32.xlu0 %v638, 91
        %v771 = vpop.permute.xlu0 %770
        %772 = vrot.lane.b32.xlu0 %v639, 91
        %v773 = vpop.permute.xlu0 %772
        %v774 = vsel %vm346, %v763, %v765
        %v775 = vsel %vm346, %v765, %v767
        %v776 = vsel %vm346, %v769, %v771
        %v777 = vsel %vm346, %v771, %v773
        %778 = vrot.lane.b32.xlu0 %v633, 90
        %v779 = vpop.permute.xlu0 %778
        %780 = vrot.lane.b32.xlu0 %v634, 90
        %v781 = vpop.permute.xlu0 %780
        %782 = vrot.lane.b32.xlu0 %v635, 90
        %v783 = vpop.permute.xlu0 %782
        %784 = vrot.lane.b32.xlu0 %v637, 90
        %v785 = vpop.permute.xlu0 %784
        %786 = vrot.lane.b32.xlu0 %v638, 90
        %v787 = vpop.permute.xlu0 %786
        %788 = vrot.lane.b32.xlu0 %v639, 90
        %v789 = vpop.permute.xlu0 %788
        %v790 = vsel %vm358, %v779, %v781
        %v791 = vsel %vm358, %v781, %v783
        %v792 = vsel %vm358, %v785, %v787
        %v793 = vsel %vm358, %v787, %v789
        %v794 = vld [vmem:[#allocation6] sm:$0xff]
        %v795 = vld [vmem:[#allocation6 + $0x8] sm:$0xff]
        %v796 = vld [vmem:[#allocation6 + $0x10] sm:$0xff]
        %v797 = vld [vmem:[#allocation6 + $0x18] sm:$0xff]
        %v798 = vld [vmem:[%s4] sm:$0xff]
        %v799 = vld [vmem:[%s4 + $0x8] sm:$0xff]
        %801 = vset.pattern.permute.xlu0 0
        %802 = vperm.xlu0 %801, %v798
        %v803 = vpop.permute.xlu0 %802
        %806 = vset.pattern.permute.xlu0 0
        %807 = vperm.xlu0 %806, %v799
        %v808 = vpop.permute.xlu0 %807
        %810 = vrot.lane.b32.xlu0 %v632, 19
        %v811 = vpop.permute.xlu0 %810
        %812 = vrot.lane.b32.xlu0 %v633, 19
        %v813 = vpop.permute.xlu0 %812
        %814 = vrot.lane.b32.xlu0 %v634, 19
        %v815 = vpop.permute.xlu0 %814
        %816 = vrot.lane.b32.xlu0 %v635, 19
        %v817 = vpop.permute.xlu0 %816
        %818 = vrot.lane.b32.xlu0 %v636, 19
        %v819 = vpop.permute.xlu0 %818
        %820 = vrot.lane.b32.xlu0 %v637, 19
        %v821 = vpop.permute.xlu0 %820
        %822 = vrot.lane.b32.xlu0 %v638, 19
        %v823 = vpop.permute.xlu0 %822
        %824 = vrot.lane.b32.xlu0 %v639, 19
        %v825 = vpop.permute.xlu0 %824
        %826 = vrot.lane.b32.xlu0 %v664, 19
        %v827 = vpop.permute.xlu0 %826
        %828 = vrot.lane.b32.xlu0 %v665, 19
        %v829 = vpop.permute.xlu0 %828
        %830 = vrot.lane.b32.xlu0 %v666, 19
        %v831 = vpop.permute.xlu0 %830
        %832 = vrot.lane.b32.xlu0 %v655, 19
        %v833 = vpop.permute.xlu0 %832
        %834 = vrot.lane.b32.xlu0 %v667, 19
        %v835 = vpop.permute.xlu0 %834
        %836 = vrot.lane.b32.xlu0 %v668, 19
        %v837 = vpop.permute.xlu0 %836
        %838 = vrot.lane.b32.xlu0 %v669, 19
        %v839 = vpop.permute.xlu0 %838
        %840 = vrot.lane.b32.xlu0 %v663, 19
        %v841 = vpop.permute.xlu0 %840
        %842 = vrot.lane.b32.xlu0 %v686, 19
        %v843 = vpop.permute.xlu0 %842
        %844 = vrot.lane.b32.xlu0 %v687, 19
        %v845 = vpop.permute.xlu0 %844
        %846 = vrot.lane.b32.xlu0 %v688, 19
        %v847 = vpop.permute.xlu0 %846
        %848 = vrot.lane.b32.xlu0 %v677, 19
        %v849 = vpop.permute.xlu0 %848
        %850 = vrot.lane.b32.xlu0 %v689, 19
        %v851 = vpop.permute.xlu0 %850
        %852 = vrot.lane.b32.xlu0 %v690, 19
        %v853 = vpop.permute.xlu0 %852
        %854 = vrot.lane.b32.xlu0 %v691, 19
        %v855 = vpop.permute.xlu0 %854
        %856 = vrot.lane.b32.xlu0 %v685, 19
        %v857 = vpop.permute.xlu0 %856
        %858 = vrot.lane.b32.xlu0 %v708, 19
        %v859 = vpop.permute.xlu0 %858
        %860 = vrot.lane.b32.xlu0 %v709, 19
        %v861 = vpop.permute.xlu0 %860
        %862 = vrot.lane.b32.xlu0 %v710, 19
        %v863 = vpop.permute.xlu0 %862
        %864 = vrot.lane.b32.xlu0 %v699, 19
        %v865 = vpop.permute.xlu0 %864
        %866 = vrot.lane.b32.xlu0 %v711, 19
        %v867 = vpop.permute.xlu0 %866
        %868 = vrot.lane.b32.xlu0 %v712, 19
        %v869 = vpop.permute.xlu0 %868
        %870 = vrot.lane.b32.xlu0 %v713, 19
        %v871 = vpop.permute.xlu0 %870
        %872 = vrot.lane.b32.xlu0 %v707, 19
        %v873 = vpop.permute.xlu0 %872
        %874 = vrot.lane.b32.xlu0 %v715, 19
        %v875 = vpop.permute.xlu0 %874
        %876 = vrot.lane.b32.xlu0 %v726, 19
        %v877 = vpop.permute.xlu0 %876
        %878 = vrot.lane.b32.xlu0 %v727, 19
        %v879 = vpop.permute.xlu0 %878
        %880 = vrot.lane.b32.xlu0 %v719, 19
        %v881 = vpop.permute.xlu0 %880
        %882 = vrot.lane.b32.xlu0 %v721, 19
        %v883 = vpop.permute.xlu0 %882
        %884 = vrot.lane.b32.xlu0 %v728, 19
        %v885 = vpop.permute.xlu0 %884
        %886 = vrot.lane.b32.xlu0 %v729, 19
        %v887 = vpop.permute.xlu0 %886
        %888 = vrot.lane.b32.xlu0 %v725, 19
        %v889 = vpop.permute.xlu0 %888
        %890 = vrot.lane.b32.xlu0 %v731, 19
        %v891 = vpop.permute.xlu0 %890
        %892 = vrot.lane.b32.xlu0 %v742, 19
        %v893 = vpop.permute.xlu0 %892
        %894 = vrot.lane.b32.xlu0 %v743, 19
        %v895 = vpop.permute.xlu0 %894
        %896 = vrot.lane.b32.xlu0 %v735, 19
        %v897 = vpop.permute.xlu0 %896
        %898 = vrot.lane.b32.xlu0 %v737, 19
        %v899 = vpop.permute.xlu0 %898
        %900 = vrot.lane.b32.xlu0 %v744, 19
        %v901 = vpop.permute.xlu0 %900
        %902 = vrot.lane.b32.xlu0 %v745, 19
        %v903 = vpop.permute.xlu0 %902
        %904 = vrot.lane.b32.xlu0 %v741, 19
        %v905 = vpop.permute.xlu0 %904
        %906 = vrot.lane.b32.xlu0 %v747, 19
        %v907 = vpop.permute.xlu0 %906
        %908 = vrot.lane.b32.xlu0 %v758, 19
        %v909 = vpop.permute.xlu0 %908
        %910 = vrot.lane.b32.xlu0 %v759, 19
        %v911 = vpop.permute.xlu0 %910
        %912 = vrot.lane.b32.xlu0 %v751, 19
        %v913 = vpop.permute.xlu0 %912
        %914 = vrot.lane.b32.xlu0 %v753, 19
        %v915 = vpop.permute.xlu0 %914
        %916 = vrot.lane.b32.xlu0 %v760, 19
        %v917 = vpop.permute.xlu0 %916
        %918 = vrot.lane.b32.xlu0 %v761, 19
        %v919 = vpop.permute.xlu0 %918
        %920 = vrot.lane.b32.xlu0 %v757, 19
        %v921 = vpop.permute.xlu0 %920
        %922 = vrot.lane.b32.xlu0 %v763, 19
        %v923 = vpop.permute.xlu0 %922
        %924 = vrot.lane.b32.xlu0 %v774, 19
        %v925 = vpop.permute.xlu0 %924
        %926 = vrot.lane.b32.xlu0 %v775, 19
        %v927 = vpop.permute.xlu0 %926
        %928 = vrot.lane.b32.xlu0 %v767, 19
        %v929 = vpop.permute.xlu0 %928
        %930 = vrot.lane.b32.xlu0 %v769, 19
        %v931 = vpop.permute.xlu0 %930
        %932 = vrot.lane.b32.xlu0 %v776, 19
        %v933 = vpop.permute.xlu0 %932
        %934 = vrot.lane.b32.xlu0 %v777, 19
        %v935 = vpop.permute.xlu0 %934
        %936 = vrot.lane.b32.xlu0 %v773, 19
        %v937 = vpop.permute.xlu0 %936
        %938 = vrot.lane.b32.xlu0 %v779, 19
        %v939 = vpop.permute.xlu0 %938
        %940 = vrot.lane.b32.xlu0 %v790, 19
        %v941 = vpop.permute.xlu0 %940
        %942 = vrot.lane.b32.xlu0 %v791, 19
        %v943 = vpop.permute.xlu0 %942
        %944 = vrot.lane.b32.xlu0 %v783, 19
        %v945 = vpop.permute.xlu0 %944
        %946 = vrot.lane.b32.xlu0 %v785, 19
        %v947 = vpop.permute.xlu0 %946
        %948 = vrot.lane.b32.xlu0 %v792, 19
        %v949 = vpop.permute.xlu0 %948
        %950 = vrot.lane.b32.xlu0 %v793, 19
        %v951 = vpop.permute.xlu0 %950
        %952 = vrot.lane.b32.xlu0 %v789, 19
        %v953 = vpop.permute.xlu0 %952
        %vm954 = vcmask 154624
        %v955 = vsel %vm954, %v811, %v813
        %v956 = vsel %vm954, %v813, %v815
        %v957 = vsel %vm954, %v815, %v817
        %v958 = vsel %vm954, %v819, %v821
        %v959 = vsel %vm954, %v821, %v823
        %v960 = vsel %vm954, %v823, %v825
        %v961 = vsel %vm954, %v827, %v829
        %v962 = vsel %vm954, %v829, %v831
        %v963 = vsel %vm954, %v831, %v833
        %v964 = vsel %vm954, %v835, %v837
        %v965 = vsel %vm954, %v837, %v839
        %v966 = vsel %vm954, %v839, %v841
        %v967 = vsel %vm954, %v843, %v845
        %v968 = vsel %vm954, %v845, %v847
        %v969 = vsel %vm954, %v847, %v849
        %v970 = vsel %vm954, %v851, %v853
        %v971 = vsel %vm954, %v853, %v855
        %v972 = vsel %vm954, %v855, %v857
        %v973 = vsel %vm954, %v859, %v861
        %v974 = vsel %vm954, %v861, %v863
        %v975 = vsel %vm954, %v863, %v865
        %v976 = vsel %vm954, %v867, %v869
        %v977 = vsel %vm954, %v869, %v871
        %v978 = vsel %vm954, %v871, %v873
        %v979 = vsel %vm954, %v875, %v877
        %v980 = vsel %vm954, %v877, %v879
        %v981 = vsel %vm954, %v879, %v881
        %v982 = vsel %vm954, %v883, %v885
        %v983 = vsel %vm954, %v885, %v887
        %v984 = vsel %vm954, %v887, %v889
        %v985 = vsel %vm954, %v891, %v893
        %v986 = vsel %vm954, %v893, %v895
        %v987 = vsel %vm954, %v895, %v897
        %v988 = vsel %vm954, %v899, %v901
        %v989 = vsel %vm954, %v901, %v903
        %v990 = vsel %vm954, %v903, %v905
        %v991 = vsel %vm954, %v907, %v909
        %v992 = vsel %vm954, %v909, %v911
        %v993 = vsel %vm954, %v911, %v913
        %v994 = vsel %vm954, %v915, %v917
        %v995 = vsel %vm954, %v917, %v919
        %v996 = vsel %vm954, %v919, %v921
        %v997 = vsel %vm954, %v923, %v925
        %v998 = vsel %vm954, %v925, %v927
        %v999 = vsel %vm954, %v927, %v929
        %v1000 = vsel %vm954, %v931, %v933
        %v1001 = vsel %vm954, %v933, %v935
        %v1002 = vsel %vm954, %v935, %v937
        %v1003 = vsel %vm954, %v939, %v941
        %v1004 = vsel %vm954, %v941, %v943
        %v1005 = vsel %vm954, %v943, %v945
        %v1006 = vsel %vm954, %v947, %v949
        %v1007 = vsel %vm954, %v949, %v951
        %v1008 = vsel %vm954, %v951, %v953
        %vm1063 = vcmask 130048
        %v1065 = vsel %vm1063, %v795, 0
        %v1068 = vsel %vm1063, %v797, 0
        %1070 = vmatpush.msra.mxu0 %v1000
        %1071 = vmatpush.msra.mxu0 %v997
        %1072 = vmatpush.msra.mxu0 %v994
        %1073 = vmatpush.msra.mxu0 %v991
        %1074 = vmatpush.msra.mxu0 %v988
        %1075 = vmatpush.msra.mxu0 %v985
        %1076 = vmatpush.msra.mxu0 %v982
        %1077 = vmatpush.msra.mxu0 %v979
        %1078 = vmatpush.msra.mxu0 %v976
        %1079 = vmatpush.msra.mxu0 %v973
        %1080 = vmatpush.msra.mxu0 %v970
        %1081 = vmatpush.msra.mxu0 %v967
        %1082 = vmatpush.msra.mxu0 %v964
        %1083 = vmatpush.msra.mxu0 %v961
        %1084 = vmatpush.msra.mxu0 %v958
        %1085 = vmatpush.msra.mxu0 %v955
        %1086 = vmatmul.f32.gmra.mxu0 %v794
        %v1087 = vpop.f32.mrf.mxu0
        %v1088 = vadd.f32 %v803, %v1087
        %1089 = vmatmul.f32.gmra.mxu0 %v796
        %v1090 = vpop.f32.mrf.mxu0
        %v1091 = vadd.f32 %v808, %v1090
        %1092 = vdwg.mxu0
        %1093 = vmatpush.msra.mxu0 0.0
        %1094 = vmatpush.msra.mxu0 0.0
        %1095 = vmatpush.msra.mxu0 0.0
        %1096 = vmatpush.msra.mxu0 0.0
        %1097 = vmatpush.msra.mxu0 0.0
        %1098 = vmatpush.msra.mxu0 0.0
        %1099 = vmatpush.msra.mxu0 0.0
        %1100 = vmatpush.msra.mxu0 0.0
        %1101 = vmatpush.msra.mxu0 0.0
        %1102 = vmatpush.msra.mxu0 0.0
        %1103 = vmatpush.msra.mxu0 0.0
        %1104 = vmatpush.msra.mxu0 0.0
        %1105 = vmatpush.msra.mxu0 0.0
        %1106 = vmatpush.msra.mxu0 0.0
        %1107 = vmatpush.msra.mxu0 %v1006
        %1108 = vmatpush.msra.mxu0 %v1003
        %1109 = vmatmul.f32.gmra.mxu0 %v1065
        %v1110 = vpop.f32.mrf.mxu0
        %v1111 = vadd.f32 %v1088, %v1110
        %1112 = vmatmul.f32.gmra.mxu0 %v1068
        %v1113 = vpop.f32.mrf.mxu0
        %v1114 = vadd.f32 %v1091, %v1113
        %1115 = vdwg.mxu0
        %1116 = vmatpush.msra.mxu0 %v1001
        %1117 = vmatpush.msra.mxu0 %v998
        %1118 = vmatpush.msra.mxu0 %v995
        %1119 = vmatpush.msra.mxu0 %v992
        %1120 = vmatpush.msra.mxu0 %v989
        %1121 = vmatpush.msra.mxu0 %v986
        %1122 = vmatpush.msra.mxu0 %v983
        %1123 = vmatpush.msra.mxu0 %v980
        %1124 = vmatpush.msra.mxu0 %v977
        %1125 = vmatpush.msra.mxu0 %v974
        %1126 = vmatpush.msra.mxu0 %v971
        %1127 = vmatpush.msra.mxu0 %v968
        %1128 = vmatpush.msra.mxu0 %v965
        %1129 = vmatpush.msra.mxu0 %v962
        %1130 = vmatpush.msra.mxu0 %v959
        %1131 = vmatpush.msra.mxu0 %v956
        %1132 = vmatmul.f32.gmra.mxu0 %v794
        %v1133 = vpop.f32.mrf.mxu0
        %v1134 = vadd.f32 %v803, %v1133
        %1135 = vmatmul.f32.gmra.mxu0 %v796
        %v1136 = vpop.f32.mrf.mxu0
        %v1137 = vadd.f32 %v808, %v1136
        %1138 = vdwg.mxu0
        %1139 = vmatpush.msra.mxu0 0.0
        %1140 = vmatpush.msra.mxu0 0.0
        %1141 = vmatpush.msra.mxu0 0.0
        %1142 = vmatpush.msra.mxu0 0.0
        %1143 = vmatpush.msra.mxu0 0.0
        %1144 = vmatpush.msra.mxu0 0.0
        %1145 = vmatpush.msra.mxu0 0.0
        %1146 = vmatpush.msra.mxu0 0.0
        %1147 = vmatpush.msra.mxu0 0.0
        %1148 = vmatpush.msra.mxu0 0.0
        %1149 = vmatpush.msra.mxu0 0.0
        %1150 = vmatpush.msra.mxu0 0.0
        %1151 = vmatpush.msra.mxu0 0.0
        %1152 = vmatpush.msra.mxu0 0.0
        %1153 = vmatpush.msra.mxu0 %v1007
        %1154 = vmatpush.msra.mxu0 %v1004
        %1155 = vmatmul.f32.gmra.mxu0 %v1065
        %v1156 = vpop.f32.mrf.mxu0
        %v1157 = vadd.f32 %v1134, %v1156
        %1158 = vmatmul.f32.gmra.mxu0 %v1068
        %v1159 = vpop.f32.mrf.mxu0
        %v1160 = vadd.f32 %v1137, %v1159
        %1161 = vdwg.mxu0
        %1162 = vmatpush.msra.mxu0 %v1002
        %1163 = vmatpush.msra.mxu0 %v999
        %1164 = vmatpush.msra.mxu0 %v996
        %1165 = vmatpush.msra.mxu0 %v993
        %1166 = vmatpush.msra.mxu0 %v990
        %1167 = vmatpush.msra.mxu0 %v987
        %1168 = vmatpush.msra.mxu0 %v984
        %1169 = vmatpush.msra.mxu0 %v981
        %1170 = vmatpush.msra.mxu0 %v978
        %1171 = vmatpush.msra.mxu0 %v975
        %1172 = vmatpush.msra.mxu0 %v972
        %1173 = vmatpush.msra.mxu0 %v969
        %1174 = vmatpush.msra.mxu0 %v966
        %1175 = vmatpush.msra.mxu0 %v963
        %1176 = vmatpush.msra.mxu0 %v960
        %1177 = vmatpush.msra.mxu0 %v957
        %1178 = vmatmul.f32.gmra.mxu0 %v794
        %v1179 = vpop.f32.mrf.mxu0
        %v1180 = vadd.f32 %v803, %v1179
        %1181 = vmatmul.f32.gmra.mxu0 %v796
        %v1182 = vpop.f32.mrf.mxu0
        %v1183 = vadd.f32 %v808, %v1182
        %1184 = vdwg.mxu0
        %1185 = vmatpush.msra.mxu0 0.0
        %1186 = vmatpush.msra.mxu0 0.0
        %1187 = vmatpush.msra.mxu0 0.0
        %1188 = vmatpush.msra.mxu0 0.0
        %1189 = vmatpush.msra.mxu0 0.0
        %1190 = vmatpush.msra.mxu0 0.0
        %1191 = vmatpush.msra.mxu0 0.0
        %1192 = vmatpush.msra.mxu0 0.0
        %1193 = vmatpush.msra.mxu0 0.0
        %1194 = vmatpush.msra.mxu0 0.0
        %1195 = vmatpush.msra.mxu0 0.0
        %1196 = vmatpush.msra.mxu0 0.0
        %1197 = vmatpush.msra.mxu0 0.0
        %1198 = vmatpush.msra.mxu0 0.0
        %1199 = vmatpush.msra.mxu0 %v1008
        %1200 = vmatpush.msra.mxu0 %v1005
        %1201 = vmatmul.f32.gmra.mxu0 %v1065
        %v1202 = vpop.f32.mrf.mxu0
        %v1203 = vadd.f32 %v1180, %v1202
        %1204 = vmatmul.f32.gmra.mxu0 %v1068
        %v1205 = vpop.f32.mrf.mxu0
        %v1206 = vadd.f32 %v1183, %v1205
        %1207 = vdwg.mxu0
        %v1208 = vadd.f32 %v1111, %v429
        %v1209 = vadd.f32 %v1157, %v458
        %v1210 = vadd.f32 %v1203, %v487
        %v1211 = vadd.f32 %v1114, %v432
        %v1212 = vadd.f32 %v1160, %v461
        %v1213 = vadd.f32 %v1206, %v490
        %1214 = vst [vmem:[%s251] sm:$0xff] %v1208
        %1215 = vst [vmem:[%s251 + $0x8] sm:$0xff] %v1209
        %1216 = vst.msk [vmem:[%s251 + $0x10] sm:$0xff] %vm627, %v1210
        %1217 = vst [vmem:[%s251 + $0x18] sm:$0xff] %v1211
        %1218 = vst [vmem:[%s251 + $0x20] sm:$0xff] %v1212
        %1219 = vst.msk [vmem:[%s251 + $0x28] sm:$0xff] %vm627, %v1213
        %s1220 = sand.u32 %s139, 1
        %s1221 = scalar_lea.sflag [#allocation5], %s1220
        %s1222 = sand.u32 %s139, 1
        %s1223 = smul.addr %s1222, 48
        %s1224 = scalar_lea.vmem [#allocation8], %s1223
        // Predicated region
        $region49: #{tpu_custom_call.1} parent=39 // pred_check
          %p1225 = pneg %p149
        $region50: #{tpu_custom_call.1} parent=39 // pred_check_branch
          %1227 = sbr.rel (%p1225) target = $region52
        $region51: #{tpu_custom_call.1} parent=39 // pred_region
          %1229 = vsyncadd %s1221, 0
          %s1230 = smul.addr %s21, 6
          %s1231 = smul.addr %s1230, 8
          %s1232 = scalar_lea.hbm %s5, %s1231
          %s1233 = sshll.u32 %s1224, 4
          %s1234 = int_to_ptr.vmem [resolvable:$true] %s1233
          %s1235 = sshll.u32 %s1232, 4
          %s1236 = int_to_ptr.hbm [resolvable:$true] %s1235
          %1241 = dma.vmem_to_hbm [thread:$0]  %s1234, 768, %s1236, %s1221, 384, 384, 24
        $region52: #{tpu_custom_call.1} parent=39 // pred_fallthru
          _
      $region40: #{tpu_custom_call.1} parent=5 // pred_fallthru
        _
      %p1242 = scmp.le.s32.totalorder 2, %s16
      // Predicated region
      $region53: #{tpu_custom_call.1} parent=5 // pred_check
        %p1243 = pneg %p1242
      $region54: #{tpu_custom_call.1} parent=5 // pred_check_branch
        %1245 = sbr.rel (%p1243) target = $region56
      $region55: #{tpu_custom_call.1} parent=5 // pred_region
        %s1246 = ssub.s32 %s16, 2
        // Predicated region
        $region57: #{tpu_custom_call.1} parent=55 // pred_check
          %p1247 = pneg %p155
        $region58: #{tpu_custom_call.1} parent=55 // pred_check_branch
          %1249 = sbr.rel (%p1247) target = $region60
        $region59: #{tpu_custom_call.1} parent=55 // pred_region
          %s1250 = sand.u32 %s140, 1
          %s1251 = scalar_lea.sflag [#allocation5], %s1250
          %s1252 = sand.u32 %s140, 1
          %s1253 = smul.addr %s1252, 48
          %s1254 = scalar_lea.vmem [#allocation8], %s1253
          %1256 = dma.done %s1251, 768
        $region60: #{tpu_custom_call.1} parent=55 // pred_fallthru
          _
      $region56: #{tpu_custom_call.1} parent=5 // pred_fallthru
        _
    $region6: #{tpu_custom_call.1} parent=1 // loop_footer
      %s20 = sadd.s32 1, %s16
    $region7: #{tpu_custom_call.1} parent=1 // loop_footer_branch
      %15 = sbr.rel target = $region3
    $region8: #{tpu_custom_call.1} parent=1 // loop_exit
      _
    %1257 = vsyncpa [#allocation4], 1
    %s1258 = scalar_lea.sflag [#allocation4], 1
    %1259 = vsyncpa %s1258, 1
    %1260 = vsyncpa [#allocation7], 1
    %1261 = vsyncpa [#allocation5], 1
    %s1262 = scalar_lea.sflag [#allocation5], 1
    %1263 = vsyncpa %s1262, 1

</llo_original>
